<compile_context>
chip_gen: v5e
topology: v5e:2x2
jax: 0.10.0
libtpu: 0.0.40
codegen_flags: <defaults>
</compile_context>

<pallas_src>
import math

import jax
import jax.numpy as jnp
from jax.experimental import pallas as pl
from jax.experimental.pallas import tpu as pltpu


def timestep_embedder_kernel(t_ref, freqs_ref, w1_ref, b1_ref, w2_ref, b2_ref,
                             o_ref, h_ref):
    # The layer-1 activation does not depend on the hidden-out tile: compute it
    # once per N tile (innermost axis j == 0) and keep it in VMEM scratch.
    @pl.when(pl.program_id(1) == 0)
    def _():
        # Sinusoidal embedding; transcendentals stay in f32 (v5e EUP/VPU have
        # no bf16 path). concat along the lane axis is pure tile placement.
        args = t_ref[...] * freqs_ref[...]                      # (bn, half) f32
        emb = jnp.concatenate([jnp.cos(args), jnp.sin(args)], axis=-1)

        # Layer 1: single K = freq_dim matmul (full depth on the 256-deep
        # v6e/v7x MXUs; v5e's 128x128 MXU runs it as two accumulating passes).
        h = (jnp.dot(emb.astype(w1_ref.dtype), w1_ref[...],
                     preferred_element_type=jnp.float32) + b1_ref[...])

        # SiLU: h * sigmoid(h) == h * 0.5 * (tanh(0.5*h) + 1)   (one EUP push)
        h = h * (0.5 * jnp.tanh(0.5 * h) + 0.5)
        h_ref[...] = h.astype(h_ref.dtype)

    # Layer 2 for this (N tile, hidden-out tile).
    out = (jnp.dot(h_ref[...], w2_ref[...], preferred_element_type=jnp.float32)
           + b2_ref[...])
    o_ref[...] = out.astype(o_ref.dtype)


def _round_up(x, m):
    return (x + m - 1) // m * m


def timestep_embedder(t, w1, b1, w2, b2, *, block_n=512, block_h=None,
                      weight_dtype=jnp.bfloat16, out_dtype=jnp.float32):
    """t: (N,) timesteps. Returns (N, hidden_size) in `out_dtype`.

    Pass out_dtype=jnp.bfloat16 when downstream DiT blocks consume bf16 — at
    large N the f32 writeback dominates HBM traffic for this kernel.
    """
    n = t.shape[0]
    freq_dim, hidden = w1.shape
    # TODO(synk): odd frequency_embedding_size (PyTorch zero-pads the last column) not handled.
    assert freq_dim % 2 == 0, "frequency_embedding_size must be even"
    half = freq_dim // 2

    # N tile: multiple of 8 (sublane), capped by block_n; pad N only if needed.
    bn = min(_round_up(block_n, 8), _round_up(n, 8))
    n_pad = _round_up(n, bn)
    n_tiles = n_pad // bn

    # Hidden-out tile: single tile by default; column-tile W2 when the fully
    # resident W2 would be too large (e.g. v7x's 64 MiB VMEM at large H).
    w_itemsize = jnp.dtype(weight_dtype).itemsize
    if block_h is None and hidden * hidden * w_itemsize > (16 << 20):
        block_h = 1024
    if block_h is None:
        bh = hidden
    else:
        bh = _round_up(block_h, 128)
        if bh >= hidden or hidden % bh != 0:
            bh = hidden
    h_tiles = hidden // bh

    t2 = t.astype(jnp.float32).reshape(n, 1)
    if n_pad != n:
        t2 = jnp.pad(t2, ((0, n_pad - n), (0, 0)))

    freqs = jnp.exp(
        (-math.log(10000.0) / half) * jnp.arange(half, dtype=jnp.float32)
    ).reshape(1, half)

    w1b = w1.astype(weight_dtype)                       # (F, H)
    w2b = w2.astype(weight_dtype)                       # (H, H)
    b1_2 = b1.reshape(1, hidden).astype(jnp.float32)
    b2_2 = b2.reshape(1, hidden).astype(jnp.float32)

    # Constant-index blocks never get re-fetched -> single-buffer them.
    resident = pl.Buffered(1)
    # W2/b2 columns are constant only when there is a single hidden tile;
    # otherwise keep default double-buffering so column DMAs pipeline.
    w2_mode = pl.Buffered(1) if h_tiles == 1 else None

    o_itemsize = jnp.dtype(out_dtype).itemsize
    cost = pl.CostEstimate(
        flops=2 * n_pad * (freq_dim * hidden + hidden * hidden),
        transcendentals=n_pad * (2 * half + hidden),    # sin + cos + tanh
        bytes_accessed=((w1b.size + w2b.size) * w_itemsize
                        + (b1_2.size + b2_2.size + freqs.size + t2.size) * 4
                        + n_pad * hidden * o_itemsize),
    )

    out = pl.pallas_call(
        timestep_embedder_kernel,
        out_shape=jax.ShapeDtypeStruct((n_pad, hidden), out_dtype),
        grid=(n_tiles, h_tiles),
        in_specs=[
            pl.BlockSpec((bn, 1), lambda i, j: (i, 0)),                 # t tile
            pl.BlockSpec((1, half), lambda i, j: (0, 0),
                         pipeline_mode=resident),                       # freqs
            pl.BlockSpec((freq_dim, hidden), lambda i, j: (0, 0),
                         pipeline_mode=resident),                       # W1
            pl.BlockSpec((1, hidden), lambda i, j: (0, 0),
                         pipeline_mode=resident),                       # b1
            pl.BlockSpec((hidden, bh), lambda i, j: (0, j),
                         pipeline_mode=w2_mode),                        # W2 cols
            pl.BlockSpec((1, bh), lambda i, j: (0, j),
                         pipeline_mode=w2_mode),                        # b2 cols
        ],
        out_specs=pl.BlockSpec((bn, bh), lambda i, j: (i, j)),
        scratch_shapes=[pltpu.VMEM((bn, hidden), weight_dtype)],        # h (SiLU)
        compiler_params=pltpu.CompilerParams(
            # N axis is parallel (megacore); hidden axis carries the h scratch.
            dimension_semantics=("parallel", "arbitrary")),
        cost_estimate=cost,
    )(t2, freqs, w1b, b1_2, w2b, b2_2)

    return out if n_pad == n else out[:n]


def _reference_f32(t, w1, b1, w2, b2):
    """Pure-JAX f32 reference matching the PyTorch module semantics."""
    freq_dim = w1.shape[0]
    half = freq_dim // 2
    freqs = jnp.exp(-math.log(10000.0) * jnp.arange(half, dtype=jnp.float32) / half)
    args = t.astype(jnp.float32)[:, None] * freqs[None]
    emb = jnp.concatenate([jnp.cos(args), jnp.sin(args)], axis=-1)
    h = emb @ w1 + b1
    h = h * jax.nn.sigmoid(h)
    return h @ w2 + b2


def _reference_bf16(t, w1, b1, w2, b2):
    """Reference replicating the kernel's bf16 MXU operands / f32 accumulation."""
    half = w1.shape[0] // 2
    freqs = jnp.exp(-math.log(10000.0) * jnp.arange(half, dtype=jnp.float32) / half)
    args = t.astype(jnp.float32)[:, None] * freqs[None]
    emb = jnp.concatenate([jnp.cos(args), jnp.sin(args)], axis=-1).astype(jnp.bfloat16)
    h = (jnp.dot(emb, w1.astype(jnp.bfloat16),
                 preferred_element_type=jnp.float32) + b1)
    h = h * jax.nn.sigmoid(h)
    return (jnp.dot(h.astype(jnp.bfloat16), w2.astype(jnp.bfloat16),
                    preferred_element_type=jnp.float32) + b2)


if __name__ == "__main__":
    hidden_size = 128
    freq_size = 256
    batch = 8

    key = jax.random.PRNGKey(0)
    k_t, k_w1, k_b1, k_w2, k_b2 = jax.random.split(key, 5)

    # Deterministic synthetic parameters (stored as (in, out) = torch weight.T).
    t = jax.random.uniform(k_t, (batch,), jnp.float32) * 1000.0
    w1 = jax.random.normal(k_w1, (freq_size, hidden_size), jnp.float32) * 0.02
    b1 = jax.random.normal(k_b1, (hidden_size,), jnp.float32) * 0.02
    w2 = jax.random.normal(k_w2, (hidden_size, hidden_size), jnp.float32) * 0.02
    b2 = jax.random.normal(k_b2, (hidden_size,), jnp.float32) * 0.02

    out = jax.block_until_ready(timestep_embedder(t, w1, b1, w2, b2))
    assert out.shape == (batch, hidden_size)

    # Tight check against a reference that mimics the kernel's bf16 MXU inputs.
    ref_bf16 = _reference_bf16(t, w1, b1, w2, b2)
    err_bf16 = float(jnp.abs(out - ref_bf16).max())
    assert jnp.allclose(out, ref_bf16, atol=2e-3, rtol=2e-2), err_bf16

    # Looser check against the full-f32 PyTorch-semantics reference
    # (bf16 weights introduce ~1e-2 relative error, acceptable for an embedder).
    ref_f32 = _reference_f32(t, w1, b1, w2, b2)
    err_f32 = float(jnp.abs(out - ref_f32).max())
    assert jnp.allclose(out, ref_f32, atol=1e-2, rtol=1e-2), err_f32

    print("KERNEL_OK")
</pallas_src>

<mosaic_0001>
module attributes {stable_mosaic.version = 11 : i64} {
  func.func @timestep_embedder_kernel(%arg0: i32, %arg1: i32, %arg2: memref<8x1xf32, #tpu.memory_space<vmem>>, %arg3: memref<1x128xf32, #tpu.memory_space<vmem>>, %arg4: memref<256x128xbf16, #tpu.memory_space<vmem>>, %arg5: memref<1x128xf32, #tpu.memory_space<vmem>>, %arg6: memref<128x128xbf16, #tpu.memory_space<vmem>>, %arg7: memref<1x128xf32, #tpu.memory_space<vmem>>, %arg8: memref<8x128xf32, #tpu.memory_space<vmem>>, %arg9: memref<8x128xbf16, #tpu.memory_space<vmem>>) attributes {dimension_semantics = [#tpu.dimension_semantics<parallel>, #tpu.dimension_semantics<arbitrary>], iteration_bounds = array<i64: 1, 1>, scalar_prefetch = 0 : i64, scratch_operands = 1 : i64, tpu.core_type = #tpu.core_type<tc>, window_params = [{transform_indices = @transform_0, window_bounds = array<i64: 8, 1>}, {pipeline_mode = #tpu.pipeline_mode<synchronous>, transform_indices = @transform_1, window_bounds = array<i64: 1, 128>}, {pipeline_mode = #tpu.pipeline_mode<synchronous>, transform_indices = @transform_2, window_bounds = array<i64: 256, 128>}, {pipeline_mode = #tpu.pipeline_mode<synchronous>, transform_indices = @transform_3, window_bounds = array<i64: 1, 128>}, {pipeline_mode = #tpu.pipeline_mode<synchronous>, transform_indices = @transform_4, window_bounds = array<i64: 128, 128>}, {pipeline_mode = #tpu.pipeline_mode<synchronous>, transform_indices = @transform_5, window_bounds = array<i64: 1, 128>}, {transform_indices = @transform_6, window_bounds = array<i64: 8, 128>}]} {
    %c0_i32 = arith.constant 0 : i32
    %0 = arith.cmpi eq, %arg1, %c0_i32 : i32
    %1 = arith.extui %0 : i1 to i32
    %c0_i32_0 = arith.constant 0 : i32
    %2 = arith.cmpi ne, %1, %c0_i32_0 : i32
    scf.if %2 {
      %c0_8 = arith.constant 0 : index
      %c0_9 = arith.constant 0 : index
      %10 = vector.load %arg2[%c0_8, %c0_9] : memref<8x1xf32, #tpu.memory_space<vmem>>, vector<8x1xf32>
      %c0_10 = arith.constant 0 : index
      %c0_11 = arith.constant 0 : index
      %11 = vector.load %arg3[%c0_10, %c0_11] : memref<1x128xf32, #tpu.memory_space<vmem>>, vector<1x128xf32>
      %12 = vector.broadcast %10 : vector<8x1xf32> to vector<8x128xf32>
      %13 = vector.broadcast %11 : vector<1x128xf32> to vector<8x128xf32>
      %14 = arith.mulf %12, %13 : vector<8x128xf32>
      %15 = math.cos %14 : vector<8x128xf32>
      %16 = math.sin %14 : vector<8x128xf32>
      %17 = tpu.concatenate %15, %16 in 1 : vector<8x128xf32>, vector<8x128xf32> -> vector<8x256xf32>
      %18 = arith.truncf %17 : vector<8x256xf32> to vector<8x256xbf16>
      %c0_12 = arith.constant 0 : index
      %c0_13 = arith.constant 0 : index
      %19 = vector.load %arg4[%c0_12, %c0_13] : memref<256x128xbf16, #tpu.memory_space<vmem>>, vector<256x128xbf16>
      %cst_14 = arith.constant dense<0.000000e+00> : vector<8x128xf32>
      %20 = tpu.matmul %18, %19, %cst_14 {dimension_numbers = #tpu.dot_dimension_numbers<[1], [0], [0], [1], [0, 0, 1, 1], [], []>} : vector<8x256xbf16>, vector<256x128xbf16>, vector<8x128xf32> -> vector<8x128xf32>
      %c0_15 = arith.constant 0 : index
      %c0_16 = arith.constant 0 : index
      %21 = vector.load %arg5[%c0_15, %c0_16] : memref<1x128xf32, #tpu.memory_space<vmem>>, vector<1x128xf32>
      %22 = vector.broadcast %21 : vector<1x128xf32> to vector<8x128xf32>
      %23 = arith.addf %20, %22 : vector<8x128xf32>
      %cst_17 = arith.constant 5.000000e-01 : f32
      %24 = vector.broadcast %cst_17 : f32 to vector<8x128xf32>
      %25 = arith.mulf %24, %23 : vector<8x128xf32>
      %26 = math.tanh %25 : vector<8x128xf32>
      %cst_18 = arith.constant 5.000000e-01 : f32
      %27 = vector.broadcast %cst_18 : f32 to vector<8x128xf32>
      %28 = arith.mulf %27, %26 : vector<8x128xf32>
      %cst_19 = arith.constant 5.000000e-01 : f32
      %29 = vector.broadcast %cst_19 : f32 to vector<8x128xf32>
      %30 = arith.addf %28, %29 : vector<8x128xf32>
      %31 = arith.mulf %23, %30 : vector<8x128xf32>
      %32 = arith.truncf %31 : vector<8x128xf32> to vector<8x128xbf16>
      %c0_20 = arith.constant 0 : index
      %c0_21 = arith.constant 0 : index
      %33 = vector.load %arg9[%c0_20, %c0_21] : memref<8x128xbf16, #tpu.memory_space<vmem>>, vector<8x128xbf16>
      tpu.vector_store %arg9[%c0_20, %c0_21], %32 {strides = array<i32>} : memref<8x128xbf16, #tpu.memory_space<vmem>>, vector<8x128xbf16>,
    } else {
    }
    %c0 = arith.constant 0 : index
    %c0_1 = arith.constant 0 : index
    %3 = vector.load %arg9[%c0, %c0_1] : memref<8x128xbf16, #tpu.memory_space<vmem>>, vector<8x128xbf16>
    %c0_2 = arith.constant 0 : index
    %c0_3 = arith.constant 0 : index
    %4 = vector.load %arg6[%c0_2, %c0_3] : memref<128x128xbf16, #tpu.memory_space<vmem>>, vector<128x128xbf16>
    %cst = arith.constant dense<0.000000e+00> : vector<8x128xf32>
    %5 = tpu.matmul %3, %4, %cst {dimension_numbers = #tpu.dot_dimension_numbers<[1], [0], [0], [1], [0, 0, 1, 1], [], []>} : vector<8x128xbf16>, vector<128x128xbf16>, vector<8x128xf32> -> vector<8x128xf32>
    %c0_4 = arith.constant 0 : index
    %c0_5 = arith.constant 0 : index
    %6 = vector.load %arg7[%c0_4, %c0_5] : memref<1x128xf32, #tpu.memory_space<vmem>>, vector<1x128xf32>
    %7 = vector.broadcast %6 : vector<1x128xf32> to vector<8x128xf32>
    %8 = arith.addf %5, %7 : vector<8x128xf32>
    %c0_6 = arith.constant 0 : index
    %c0_7 = arith.constant 0 : index
    %9 = vector.load %arg8[%c0_6, %c0_7] : memref<8x128xf32, #tpu.memory_space<vmem>>, vector<8x128xf32>
    tpu.vector_store %arg8[%c0_6, %c0_7], %8 {strides = array<i32>} : memref<8x128xf32, #tpu.memory_space<vmem>>, vector<8x128xf32>,
    return
  }
  func.func @transform_0(%arg0: i32, %arg1: i32) -> (i32, i32) {
    %c0_i32 = arith.constant 0 : i32
    %c0_i32_0 = arith.constant 0 : i32
    return %arg0, %c0_i32 : i32, i32
  }
  func.func @transform_1(%arg0: i32, %arg1: i32) -> (i32, i32) {
    %c0_i32 = arith.constant 0 : i32
    %c0_i32_0 = arith.constant 0 : i32
    %c0_i32_1 = arith.constant 0 : i32
    return %c0_i32, %c0_i32_0 : i32, i32
  }
  func.func @transform_2(%arg0: i32, %arg1: i32) -> (i32, i32) {
    %c0_i32 = arith.constant 0 : i32
    %c0_i32_0 = arith.constant 0 : i32
    %c0_i32_1 = arith.constant 0 : i32
    return %c0_i32, %c0_i32_0 : i32, i32
  }
  func.func @transform_3(%arg0: i32, %arg1: i32) -> (i32, i32) {
    %c0_i32 = arith.constant 0 : i32
    %c0_i32_0 = arith.constant 0 : i32
    %c0_i32_1 = arith.constant 0 : i32
    return %c0_i32, %c0_i32_0 : i32, i32
  }
  func.func @transform_4(%arg0: i32, %arg1: i32) -> (i32, i32) {
    %c0_i32 = arith.constant 0 : i32
    %c0_i32_0 = arith.constant 0 : i32
    return %c0_i32, %arg1 : i32, i32
  }
  func.func @transform_5(%arg0: i32, %arg1: i32) -> (i32, i32) {
    %c0_i32 = arith.constant 0 : i32
    %c0_i32_0 = arith.constant 0 : i32
    return %c0_i32, %arg1 : i32, i32
  }
  func.func @transform_6(%arg0: i32, %arg1: i32) -> (i32, i32) {
    %c0_i32 = arith.constant 0 : i32
    return %arg0, %arg1 : i32, i32
  }
}

</mosaic_0001>

<llo_original>
// kernel: tpu_custom_call.1
$region0: #{tpu_custom_call.1}
  #allocation0 [shape = 'u32[]', space=smem, size = 0x4, offset = 0x4, fixed_abs, tag = 'smem constant byte address 0x4 - core index']
  #allocation1 [shape = 'u32[72,128]{1,0:T(1,128)}', space=vmem, size = 0x9000, scoped, tag = 'internal scratch']
  #allocation2 [shape = 'bf16[8,128]{1,0:T(8,128)(2,1)}', space=vmem, size = 0x800, scoped, tag = 'scratch operand']
  %s0 = inlined_call_operand.vmem [shape: f32[8,1], index: 0, kind: input, shape index: {}]
  %s1 = inlined_call_operand.vmem [shape: f32[1,128], index: 1, kind: input, shape index: {}]
  %s2 = inlined_call_operand.hbm [shape: bf16[256,128], index: 2, kind: input, shape index: {}]
  %s3 = inlined_call_operand.vmem [shape: f32[1,128], index: 3, kind: input, shape index: {}]
  %s4 = inlined_call_operand.hbm [shape: bf16[128,128], index: 4, kind: input, shape index: {}]
  %s5 = inlined_call_operand.vmem [shape: f32[1,128], index: 5, kind: input, shape index: {}]
  %s6 = inlined_call_operand.hbm [shape: f32[8,128], index: 6, kind: output, shape index: {}]
  %s7 = sld [smem:[#allocation0]]
  $region46: #{tpu_custom_call.1} parent=0
    _
  %s9 = ssub.s32 1, %s7
  %s10 = scalar_select 0, %s9, %s7
  $region1: #{tpu_custom_call.1} parent=0
    #allocation3 [shape = 'u8[65536]{0}', space=vmem, size = 0x10000, scoped, tag = 'input window, operand 2, single buffered']
    #allocation4 [shape = 's32[1]{0}', space=sflag, size = 0x4, scoped, tag = 'scoped memory for tpu_custom_call.1']
    #allocation5 [shape = 's32[1]{0}', space=sflag, size = 0x4, scoped, tag = 'scoped memory for tpu_custom_call.1']
    #allocation6 [shape = 'u8[32768]{0}', space=vmem, size = 0x8000, scoped, tag = 'input window, operand 4, single buffered']
    #allocation7 [shape = 's32[1]{0}', space=sflag, size = 0x4, scoped, tag = 'scoped memory for tpu_custom_call.1']
    #allocation8 [shape = 'u8[4096]{0}', space=vmem, size = 0x1000, scoped, tag = 'output window, operand 0, single buffered']
    %11 = vsyncpa [#allocation4], 0
    %12 = vsyncpa [#allocation7], 0
    %13 = vsyncpa [#allocation5], 0
    // Predicated region
    $region2: #{tpu_custom_call.1} parent=1 // pred_check
      _
    $region3: #{tpu_custom_call.1} parent=1 // pred_check_branch
      %15 = sbr.rel (0) target = $region5
    $region4: #{tpu_custom_call.1} parent=1 // pred_region
      _
    $region5: #{tpu_custom_call.1} parent=1 // pred_fallthru
      _
    // Predicated region
    $region6: #{tpu_custom_call.1} parent=1 // pred_check
      _
    $region7: #{tpu_custom_call.1} parent=1 // pred_check_branch
      %17 = sbr.rel (0) target = $region9
    $region8: #{tpu_custom_call.1} parent=1 // pred_region
      _
    $region9: #{tpu_custom_call.1} parent=1 // pred_fallthru
      _
    // Predicated region
    $region10: #{tpu_custom_call.1} parent=1 // pred_check
      _
    $region11: #{tpu_custom_call.1} parent=1 // pred_check_branch
      %19 = sbr.rel (0) target = $region13
    $region12: #{tpu_custom_call.1} parent=1 // pred_region
      %21 = vsyncadd [#allocation4], 0
      %s22 = sshll.u32 %s2, 4
      %s23 = int_to_ptr.hbm [resolvable:$true] %s22
      %s24 = sshll.u32 [#allocation3], 4
      %s25 = int_to_ptr.vmem [resolvable:$true] %s24
      %30 = dma.hbm_to_vmem [thread:$0]  %s23, 2048, %s25, [#allocation4], 64, 64, 4
    $region13: #{tpu_custom_call.1} parent=1 // pred_fallthru
      _
    // Predicated region
    $region14: #{tpu_custom_call.1} parent=1 // pred_check
      _
    $region15: #{tpu_custom_call.1} parent=1 // pred_check_branch
      %32 = sbr.rel (0) target = $region17
    $region16: #{tpu_custom_call.1} parent=1 // pred_region
      _
    $region17: #{tpu_custom_call.1} parent=1 // pred_fallthru
      _
    // Predicated region
    $region18: #{tpu_custom_call.1} parent=1 // pred_check
      _
    $region19: #{tpu_custom_call.1} parent=1 // pred_check_branch
      %34 = sbr.rel (0) target = $region21
    $region20: #{tpu_custom_call.1} parent=1 // pred_region
      %36 = vsyncadd [#allocation7], 0
      %s37 = sshll.u32 %s4, 4
      %s38 = int_to_ptr.hbm [resolvable:$true] %s37
      %s39 = sshll.u32 [#allocation6], 4
      %s40 = int_to_ptr.vmem [resolvable:$true] %s39
      %45 = dma.hbm_to_vmem [thread:$0]  %s38, 1024, %s40, [#allocation7], 64, 64, 4
    $region21: #{tpu_custom_call.1} parent=1 // pred_fallthru
      _
    // Predicated region
    $region22: #{tpu_custom_call.1} parent=1 // pred_check
      _
    $region23: #{tpu_custom_call.1} parent=1 // pred_check_branch
      %47 = sbr.rel (0) target = $region25
    $region24: #{tpu_custom_call.1} parent=1 // pred_region
      _
    $region25: #{tpu_custom_call.1} parent=1 // pred_fallthru
      _
    // Predicated region
    $region26: #{tpu_custom_call.1} parent=1 // pred_check
      _
    $region27: #{tpu_custom_call.1} parent=1 // pred_check_branch
      %49 = sbr.rel (0) target = $region29
    $region28: #{tpu_custom_call.1} parent=1 // pred_region
      %51 = dma.done [#allocation4], 2048
    $region29: #{tpu_custom_call.1} parent=1 // pred_fallthru
      _
    // Predicated region
    $region30: #{tpu_custom_call.1} parent=1 // pred_check
      _
    $region31: #{tpu_custom_call.1} parent=1 // pred_check_branch
      %53 = sbr.rel (0) target = $region33
    $region32: #{tpu_custom_call.1} parent=1 // pred_region
      %55 = dma.done [#allocation7], 1024
    $region33: #{tpu_custom_call.1} parent=1 // pred_fallthru
      _
    %p56 = scmp.eq.s32.totalorder 0, 0
    // Predicated region
    $region34: #{tpu_custom_call.1} parent=1 // pred_check
      %p57 = pneg %p56
    $region35: #{tpu_custom_call.1} parent=1 // pred_check_branch
      %59 = sbr.rel (%p57) target = $region37
    $region36: #{tpu_custom_call.1} parent=1 // pred_region
      %v60 = vld [vmem:[%s0] sm:$0xff]
      %v61 = vld [vmem:[%s1] sm:$0x1]
      %63 = vset.pattern.permute.xlu0 0
      %64 = vperm.xlu0 %63, %v60
      %v65 = vpop.permute.xlu0 %64
      %v68 = vperm.slane %v61, 0
      %v70 = vmul.f32 %v65, %v68
      %v71 = vand.u32 2147483647, %v70
      %vm72 = vcmp.le.f32.partialorder %v71, 0.7853982
      %vm73 = vcmp.lt.s32.totalorder %v70, 0
      %v74 = vand.u32 %v70, 2139095040
      %v75 = vshrl.u32 %v74, 23
      %v76 = vsub.s32 %v75, 127
      %v77 = vand.u32 2147483647, %v70
      %v78 = vand.u32 %v77, 8388607
      %v79 = vor.u32 %v78, 8388608
      %v80 = vsub.s32 0, %v79
      %v81 = vadd.s32 %v76, 1
      %vm82 = vcmp.gt.s32.totalorder %v81, 0
      %v83 = vsel %vm82, %v81, 0
      %v84 = vshrl.u32 %v83, 5
      %v85 = vand.u32 %v83, 31
      %v86 = vsub.s32 32, %v85
      %v87 = vshrl.u32 683565275, %v86
      %v88 = vshll.u32 683565275, %v85
      %v89 = vshrl.u32 2475754826, %v86
      %v90 = vor.u32 %v88, %v89
      %v91 = vshll.u32 2475754826, %v85
      %v92 = vshrl.u32 2131351028, %v86
      %v93 = vor.u32 %v91, %v92
      %v94 = vshll.u32 2131351028, %v85
      %v95 = vshrl.u32 2102212464, %v86
      %v96 = vor.u32 %v94, %v95
      %v97 = vshll.u32 2102212464, %v85
      %v98 = vshrl.u32 920167782, %v86
      %v99 = vor.u32 %v97, %v98
      %v100 = vshll.u32 920167782, %v85
      %v101 = vshrl.u32 1326507024, %v86
      %v102 = vor.u32 %v100, %v101
      %vm103 = vcmp.lt.s32.totalorder %v84, 1
      %vm104 = vcmp.lt.s32.totalorder %v84, 2
      %vm105 = vcmp.lt.s32.totalorder %v84, 3
      %vm106 = vcmp.lt.s32.totalorder %v84, 4
      %v107 = vsel %vm103, %v87, %v90
      %v108 = vsel %vm106, %v96, 2102212464
      %v109 = vsel %vm105, %v93, %v108
      %v110 = vsel %vm104, %v107, %v109
      %v111 = vsel %vm103, %v90, %v93
      %v112 = vsel %vm106, %v99, 920167782
      %v113 = vsel %vm105, %v96, %v112
      %v114 = vsel %vm104, %v111, %v113
      %v115 = vsel %vm103, %v93, %v96
      %v116 = vsel %vm106, %v102, 1326507024
      %v117 = vsel %vm105, %v99, %v116
      %v118 = vsel %vm104, %v115, %v117
      %v119 = vshll.u32 %v79, 8
      %v120 = vand.u32 %v119, 65535
      %v121 = vshrl.u32 %v119, 16
      %v122 = vand.u32 %v118, 65535
      %v123 = vshrl.u32 %v118, 16
      %v124 = vmul.u32 %v120, %v122
      %v125 = vmul.u32 %v120, %v123
      %v126 = vmul.u32 %v121, %v122
      %v127 = vmul.u32 %v121, %v123
      %v128 = vshll.u32 %v125, 16
      %v129 = vshrl.u32 %v125, 16
      %v130 = vshll.u32 %v126, 16
      %v131 = vshrl.u32 %v126, 16
      %vm132 = vc.u32 %v124, %v128
      %v133 = vsel %vm132, 1, 0
      %v134 = vadd.s32 %v124, %v128
      %v135 = vadd.s32 %v127, %v133
      %vm136 = vc.u32 %v134, %v130
      %v137 = vsel %vm136, 1, 0
      %v138 = vadd.s32 %v134, %v130
      %v139 = vadd.s32 %v135, %v137
      %v140 = vadd.s32 %v139, %v129
      %v141 = vadd.s32 %v140, %v131
      %v142 = vand.u32 %v119, 65535
      %v143 = vshrl.u32 %v119, 16
      %v144 = vand.u32 %v114, 65535
      %v145 = vshrl.u32 %v114, 16
      %v146 = vmul.u32 %v142, %v144
      %v147 = vmul.u32 %v142, %v145
      %v148 = vmul.u32 %v143, %v144
      %v149 = vmul.u32 %v143, %v145
      %v150 = vshll.u32 %v147, 16
      %v151 = vshrl.u32 %v147, 16
      %v152 = vshll.u32 %v148, 16
      %v153 = vshrl.u32 %v148, 16
      %vm154 = vc.u32 %v146, %v150
      %v155 = vsel %vm154, 1, 0
      %v156 = vadd.s32 %v146, %v150
      %v157 = vadd.s32 %v149, %v155
      %vm158 = vc.u32 %v156, %v152
      %v159 = vsel %vm158, 1, 0
      %v160 = vadd.s32 %v156, %v152
      %v161 = vadd.s32 %v157, %v159
      %v162 = vadd.s32 %v161, %v151
      %v163 = vadd.s32 %v162, %v153
      %v164 = vmul.u32 %v119, %v110
      %v165 = vadd.s32 %v141, %v160
      %vm166 = vc.u32 %v141, %v160
      %v167 = vadd.s32 %v163, 1
      %v168 = vsel %vm166, %v167, %v163
      %v169 = vadd.s32 %v164, %v168
      %v170 = vadd.s32 %v169, 536870912
      %v171 = vshrl.u32 %v170, 30
      %v172 = vshll.u32 %v171, 30
      %v173 = vsub.s32 %v169, %v172
      %vm174 = vcmp.lt.s32.totalorder %v173, 0
      %v175 = vsub.s32 0, %v173
      %v176 = vsel %vm174, %v175, %v173
      %v177 = vclz %v176
      %v178 = vsub.s32 %v177, 2
      %vm179 = vcmp.gt.s32.totalorder 0, %v178
      %v180 = vsel %vm179, 0, %v178
      %v181 = vsub.s32 32, %v180
      %v182 = vshll.u32 %v173, %v180
      %v183 = vshrl.u32 %v165, %v181
      %v184 = vor.u32 %v182, %v183
      %v185 = vsub.s32 4294967266, %v180
      %v186 = vadd.s32 %v185, 127
      %v187 = vshll.u32 %v186, 23
      %v188 = vor.u32 4788187, %v187
      %v189 = vand.u32 2147483647, %v188
      %v191 = vcvt.s32.f32 %v184
      %v192 = vmul.f32 %v191, %v189
      %v193 = vxor.u32 %v192, 2147483648
      %v194 = vsel %vm73, %v193, %v192
      %v195 = vsub.s32 4, %v171
      %v196 = vsel %vm73, %v195, %v171
      %v197 = vsel %vm72, %v70, %v194
      %v198 = vsel %vm72, 0, %v196
      %v199 = vmul.f32 %v197, %v197
      %v200 = vmul.f32 %v199, -0.001358992
      %v201 = vadd.f32 %v200, 0.041655596
      %v202 = vmul.f32 %v199, %v201
      %v203 = vadd.f32 %v202, -0.4999988
      %v204 = vmul.f32 %v199, %v203
      %v205 = vadd.f32 1.0, %v204
      %v206 = vmul.f32 %v197, %v197
      %v207 = vmul.f32 %v206, -0.00019511016
      %v208 = vadd.f32 %v207, 0.008332121
      %v209 = vmul.f32 %v206, %v208
      %v210 = vadd.f32 %v209, -0.16666654
      %v211 = vmul.f32 %v206, %v210
      %v212 = vadd.f32 %v211, 1.0
      %v213 = vmul.f32 %v212, %v197
      %vm214 = vweird.f32 %v70
      %v215 = vand.u32 %v198, 3
      %vm216 = vcmp.lt.s32.totalorder %v215, 2
      %vm217 = vcmp.eq.s32.totalorder %v215, 0
      %v218 = vxor.u32 %v213, 2147483648
      %v219 = vsel %vm217, %v205, %v218
      %vm220 = vcmp.eq.s32.totalorder %v215, 2
      %v221 = vxor.u32 %v205, 2147483648
      %v222 = vsel %vm220, %v221, %v213
      %v223 = vsel %vm216, %v219, %v222
      %v224 = vsel %vm214, nan, %v223
      %v225 = vand.u32 2147483647, %v70
      %vm226 = vcmp.le.f32.partialorder %v225, 0.7853982
      %vm227 = vcmp.lt.s32.totalorder %v70, 0
      %v228 = vand.u32 %v70, 2139095040
      %v229 = vshrl.u32 %v228, 23
      %v230 = vsub.s32 %v229, 127
      %v231 = vand.u32 2147483647, %v70
      %v232 = vand.u32 %v231, 8388607
      %v233 = vor.u32 %v232, 8388608
      %v234 = vsub.s32 0, %v233
      %v235 = vadd.s32 %v230, 1
      %vm236 = vcmp.gt.s32.totalorder %v235, 0
      %v237 = vsel %vm236, %v235, 0
      %v238 = vshrl.u32 %v237, 5
      %v239 = vand.u32 %v237, 31
      %v240 = vsub.s32 32, %v239
      %v241 = vshrl.u32 683565275, %v240
      %v242 = vshll.u32 683565275, %v239
      %v243 = vshrl.u32 2475754826, %v240
      %v244 = vor.u32 %v242, %v243
      %v245 = vshll.u32 2475754826, %v239
      %v246 = vshrl.u32 2131351028, %v240
      %v247 = vor.u32 %v245, %v246
      %v248 = vshll.u32 2131351028, %v239
      %v249 = vshrl.u32 2102212464, %v240
      %v250 = vor.u32 %v248, %v249
      %v251 = vshll.u32 2102212464, %v239
      %v252 = vshrl.u32 920167782, %v240
      %v253 = vor.u32 %v251, %v252
      %v254 = vshll.u32 920167782, %v239
      %v255 = vshrl.u32 1326507024, %v240
      %v256 = vor.u32 %v254, %v255
      %vm257 = vcmp.lt.s32.totalorder %v238, 1
      %vm258 = vcmp.lt.s32.totalorder %v238, 2
      %vm259 = vcmp.lt.s32.totalorder %v238, 3
      %vm260 = vcmp.lt.s32.totalorder %v238, 4
      %v261 = vsel %vm257, %v241, %v244
      %v262 = vsel %vm260, %v250, 2102212464
      %v263 = vsel %vm259, %v247, %v262
      %v264 = vsel %vm258, %v261, %v263
      %v265 = vsel %vm257, %v244, %v247
      %v266 = vsel %vm260, %v253, 920167782
      %v267 = vsel %vm259, %v250, %v266
      %v268 = vsel %vm258, %v265, %v267
      %v269 = vsel %vm257, %v247, %v250
      %v270 = vsel %vm260, %v256, 1326507024
      %v271 = vsel %vm259, %v253, %v270
      %v272 = vsel %vm258, %v269, %v271
      %v273 = vshll.u32 %v233, 8
      %v274 = vand.u32 %v273, 65535
      %v275 = vshrl.u32 %v273, 16
      %v276 = vand.u32 %v272, 65535
      %v277 = vshrl.u32 %v272, 16
      %v278 = vmul.u32 %v274, %v276
      %v279 = vmul.u32 %v274, %v277
      %v280 = vmul.u32 %v275, %v276
      %v281 = vmul.u32 %v275, %v277
      %v282 = vshll.u32 %v279, 16
      %v283 = vshrl.u32 %v279, 16
      %v284 = vshll.u32 %v280, 16
      %v285 = vshrl.u32 %v280, 16
      %vm286 = vc.u32 %v278, %v282
      %v287 = vsel %vm286, 1, 0
      %v288 = vadd.s32 %v278, %v282
      %v289 = vadd.s32 %v281, %v287
      %vm290 = vc.u32 %v288, %v284
      %v291 = vsel %vm290, 1, 0
      %v292 = vadd.s32 %v288, %v284
      %v293 = vadd.s32 %v289, %v291
      %v294 = vadd.s32 %v293, %v283
      %v295 = vadd.s32 %v294, %v285
      %v296 = vand.u32 %v273, 65535
      %v297 = vshrl.u32 %v273, 16
      %v298 = vand.u32 %v268, 65535
      %v299 = vshrl.u32 %v268, 16
      %v300 = vmul.u32 %v296, %v298
      %v301 = vmul.u32 %v296, %v299
      %v302 = vmul.u32 %v297, %v298
      %v303 = vmul.u32 %v297, %v299
      %v304 = vshll.u32 %v301, 16
      %v305 = vshrl.u32 %v301, 16
      %v306 = vshll.u32 %v302, 16
      %v307 = vshrl.u32 %v302, 16
      %vm308 = vc.u32 %v300, %v304
      %v309 = vsel %vm308, 1, 0
      %v310 = vadd.s32 %v300, %v304
      %v311 = vadd.s32 %v303, %v309
      %vm312 = vc.u32 %v310, %v306
      %v313 = vsel %vm312, 1, 0
      %v314 = vadd.s32 %v310, %v306
      %v315 = vadd.s32 %v311, %v313
      %v316 = vadd.s32 %v315, %v305
      %v317 = vadd.s32 %v316, %v307
      %v318 = vmul.u32 %v273, %v264
      %v319 = vadd.s32 %v295, %v314
      %vm320 = vc.u32 %v295, %v314
      %v321 = vadd.s32 %v317, 1
      %v322 = vsel %vm320, %v321, %v317
      %v323 = vadd.s32 %v318, %v322
      %v324 = vadd.s32 %v323, 536870912
      %v325 = vshrl.u32 %v324, 30
      %v326 = vshll.u32 %v325, 30
      %v327 = vsub.s32 %v323, %v326
      %vm328 = vcmp.lt.s32.totalorder %v327, 0
      %v329 = vsub.s32 0, %v327
      %v330 = vsel %vm328, %v329, %v327
      %v331 = vclz %v330
      %v332 = vsub.s32 %v331, 2
      %vm333 = vcmp.gt.s32.totalorder 0, %v332
      %v334 = vsel %vm333, 0, %v332
      %v335 = vsub.s32 32, %v334
      %v336 = vshll.u32 %v327, %v334
      %v337 = vshrl.u32 %v319, %v335
      %v338 = vor.u32 %v336, %v337
      %v339 = vsub.s32 4294967266, %v334
      %v340 = vadd.s32 %v339, 127
      %v341 = vshll.u32 %v340, 23
      %v342 = vor.u32 4788187, %v341
      %v343 = vand.u32 2147483647, %v342
      %v345 = vcvt.s32.f32 %v338
      %v346 = vmul.f32 %v345, %v343
      %v347 = vxor.u32 %v346, 2147483648
      %v348 = vsel %vm227, %v347, %v346
      %v349 = vsub.s32 4, %v325
      %v350 = vsel %vm227, %v349, %v325
      %v351 = vsel %vm226, %v70, %v348
      %v352 = vsel %vm226, 0, %v350
      %v353 = vmul.f32 %v351, %v351
      %v354 = vmul.f32 %v353, -0.001358992
      %v355 = vadd.f32 %v354, 0.041655596
      %v356 = vmul.f32 %v353, %v355
      %v357 = vadd.f32 %v356, -0.4999988
      %v358 = vmul.f32 %v353, %v357
      %v359 = vadd.f32 1.0, %v358
      %v360 = vmul.f32 %v351, %v351
      %v361 = vmul.f32 %v360, -0.00019511016
      %v362 = vadd.f32 %v361, 0.008332121
      %v363 = vmul.f32 %v360, %v362
      %v364 = vadd.f32 %v363, -0.16666654
      %v365 = vmul.f32 %v360, %v364
      %v366 = vadd.f32 %v365, 1.0
      %v367 = vmul.f32 %v366, %v351
      %vm368 = vweird.f32 %v70
      %v369 = vadd.s32 %v352, 3
      %v370 = vand.u32 %v369, 3
      %vm371 = vcmp.lt.s32.totalorder %v370, 2
      %vm372 = vcmp.eq.s32.totalorder %v370, 0
      %v373 = vxor.u32 %v367, 2147483648
      %v374 = vsel %vm372, %v359, %v373
      %vm375 = vcmp.eq.s32.totalorder %v370, 2
      %v376 = vxor.u32 %v359, 2147483648
      %v377 = vsel %vm375, %v376, %v367
      %v378 = vsel %vm371, %v374, %v377
      %v379 = vsel %vm368, nan, %v378
      %v380 = vpack.c.bf16 %v224, %v224
      %v381 = vpack.c.bf16 %v379, %v379
      %v382 = vld [vmem:[#allocation3] sm:$0xf]
      %v383 = vld [vmem:[#allocation3 + $0x4] sm:$0xf]
      %v384 = vld [vmem:[#allocation3 + $0x8] sm:$0xf]
      %v385 = vld [vmem:[#allocation3 + $0xc] sm:$0xf]
      %v386 = vld [vmem:[#allocation3 + $0x10] sm:$0xf]
      %v387 = vld [vmem:[#allocation3 + $0x14] sm:$0xf]
      %v388 = vld [vmem:[#allocation3 + $0x18] sm:$0xf]
      %v389 = vld [vmem:[#allocation3 + $0x1c] sm:$0xf]
      %v390 = vld [vmem:[#allocation3 + $0x20] sm:$0xf]
      %v391 = vld [vmem:[#allocation3 + $0x24] sm:$0xf]
      %v392 = vld [vmem:[#allocation3 + $0x28] sm:$0xf]
      %v393 = vld [vmem:[#allocation3 + $0x2c] sm:$0xf]
      %v394 = vld [vmem:[#allocation3 + $0x30] sm:$0xf]
      %v395 = vld [vmem:[#allocation3 + $0x34] sm:$0xf]
      %v396 = vld [vmem:[#allocation3 + $0x38] sm:$0xf]
      %v397 = vld [vmem:[#allocation3 + $0x3c] sm:$0xf]
      %v398 = vld [vmem:[#allocation3 + $0x40] sm:$0xf]
      %v399 = vld [vmem:[#allocation3 + $0x44] sm:$0xf]
      %v400 = vld [vmem:[#allocation3 + $0x48] sm:$0xf]
      %v401 = vld [vmem:[#allocation3 + $0x4c] sm:$0xf]
      %v402 = vld [vmem:[#allocation3 + $0x50] sm:$0xf]
      %v403 = vld [vmem:[#allocation3 + $0x54] sm:$0xf]
      %v404 = vld [vmem:[#allocation3 + $0x58] sm:$0xf]
      %v405 = vld [vmem:[#allocation3 + $0x5c] sm:$0xf]
      %v406 = vld [vmem:[#allocation3 + $0x60] sm:$0xf]
      %v407 = vld [vmem:[#allocation3 + $0x64] sm:$0xf]
      %v408 = vld [vmem:[#allocation3 + $0x68] sm:$0xf]
      %v409 = vld [vmem:[#allocation3 + $0x6c] sm:$0xf]
      %v410 = vld [vmem:[#allocation3 + $0x70] sm:$0xf]
      %v411 = vld [vmem:[#allocation3 + $0x74] sm:$0xf]
      %v412 = vld [vmem:[#allocation3 + $0x78] sm:$0xf]
      %v413 = vld [vmem:[#allocation3 + $0x7c] sm:$0xf]
      %v414 = vld [vmem:[%s3] sm:$0x1]
      %v416 = vperm.slane %v414, 0
      %v450 = vunpack.c.l.b16 %v382
      %v451 = vunpack.c.l.b16 %v383
      %v452 = vunpack.c.l.b16 %v384
      %v453 = vunpack.c.l.b16 %v385
      %v454 = vunpack.c.l.b16 %v386
      %v455 = vunpack.c.l.b16 %v387
      %v456 = vunpack.c.l.b16 %v388
      %v457 = vunpack.c.l.b16 %v389
      %v458 = vunpack.c.l.b16 %v390
      %v459 = vunpack.c.l.b16 %v391
      %v460 = vunpack.c.l.b16 %v392
      %v461 = vunpack.c.l.b16 %v393
      %v462 = vunpack.c.l.b16 %v394
      %v463 = vunpack.c.l.b16 %v395
      %v464 = vunpack.c.l.b16 %v396
      %v465 = vunpack.c.l.b16 %v397
      %v466 = vunpack.c.l.b16 %v398
      %v467 = vunpack.c.l.b16 %v399
      %v468 = vunpack.c.l.b16 %v400
      %v469 = vunpack.c.l.b16 %v401
      %v470 = vunpack.c.l.b16 %v402
      %v471 = vunpack.c.l.b16 %v403
      %v472 = vunpack.c.l.b16 %v404
      %v473 = vunpack.c.l.b16 %v405
      %v474 = vunpack.c.l.b16 %v406
      %v475 = vunpack.c.l.b16 %v407
      %v476 = vunpack.c.l.b16 %v408
      %v477 = vunpack.c.l.b16 %v409
      %v478 = vunpack.c.l.b16 %v410
      %v479 = vunpack.c.l.b16 %v411
      %v480 = vunpack.c.l.b16 %v412
      %v481 = vunpack.c.l.b16 %v413
      %v482 = vpack.c.b16 %v451, %v450
      %v483 = vpack.c.b16 %v453, %v452
      %v484 = vpack.c.b16 %v455, %v454
      %v485 = vpack.c.b16 %v457, %v456
      %v486 = vpack.c.b16 %v459, %v458
      %v487 = vpack.c.b16 %v461, %v460
      %v488 = vpack.c.b16 %v463, %v462
      %v489 = vpack.c.b16 %v465, %v464
      %v490 = vpack.c.b16 %v467, %v466
      %v491 = vpack.c.b16 %v469, %v468
      %v492 = vpack.c.b16 %v471, %v470
      %v493 = vpack.c.b16 %v473, %v472
      %v494 = vpack.c.b16 %v475, %v474
      %v495 = vpack.c.b16 %v477, %v476
      %v496 = vpack.c.b16 %v479, %v478
      %v497 = vpack.c.b16 %v481, %v480
      %514 = vmatpush.bf16.msra.mxu0 %v489
      %515 = vmatpush.bf16.msra.mxu0 %v488
      %516 = vmatpush.bf16.msra.mxu0 %v487
      %517 = vmatpush.bf16.msra.mxu0 %v486
      %518 = vmatpush.bf16.msra.mxu0 %v485
      %519 = vmatpush.bf16.msra.mxu0 %v484
      %520 = vmatpush.bf16.msra.mxu0 %v483
      %521 = vmatpush.bf16.msra.mxu0 %v482
      %522 = vmatmul.bf16.gmra.mxu0 %v380
      %v523 = vpop.f32.mrf.mxu0
      %v524 = vadd.f32 %v416, %v523
      %v525 = vpop.f32.mrf.mxu0
      %526 = vdwg.mxu0
      %527 = vmatpush.bf16.msra.mxu0 %v497
      %528 = vmatpush.bf16.msra.mxu0 %v496
      %529 = vmatpush.bf16.msra.mxu0 %v495
      %530 = vmatpush.bf16.msra.mxu0 %v494
      %531 = vmatpush.bf16.msra.mxu0 %v493
      %532 = vmatpush.bf16.msra.mxu0 %v492
      %533 = vmatpush.bf16.msra.mxu0 %v491
      %534 = vmatpush.bf16.msra.mxu0 %v490
      %535 = vmatmul.bf16.gmra.mxu0 %v381
      %v536 = vpop.f32.mrf.mxu0
      %v537 = vadd.f32 %v524, %v536
      %v538 = vpop.f32.mrf.mxu0
      %539 = vdwg.mxu0
      %v540 = vmul.f32 %v537, 0.5
      %v541 = vtanh.pop %v540
      %v542 = vmul.f32 %v541, 0.5
      %v543 = vadd.f32 %v542, 0.5
      %v544 = vmul.f32 %v537, %v543
      %v545 = vpack.c.bf16 %v544, %v544
      %546 = vst [vmem:[#allocation2] sm:$0xf] %v545
    $region37: #{tpu_custom_call.1} parent=1 // pred_fallthru
      _
    %v547 = vld [vmem:[#allocation2] sm:$0xf]
    %v548 = vld [vmem:[#allocation6] sm:$0xf]
    %v549 = vld [vmem:[#allocation6 + $0x4] sm:$0xf]
    %v550 = vld [vmem:[#allocation6 + $0x8] sm:$0xf]
    %v551 = vld [vmem:[#allocation6 + $0xc] sm:$0xf]
    %v552 = vld [vmem:[#allocation6 + $0x10] sm:$0xf]
    %v553 = vld [vmem:[#allocation6 + $0x14] sm:$0xf]
    %v554 = vld [vmem:[#allocation6 + $0x18] sm:$0xf]
    %v555 = vld [vmem:[#allocation6 + $0x1c] sm:$0xf]
    %v556 = vld [vmem:[#allocation6 + $0x20] sm:$0xf]
    %v557 = vld [vmem:[#allocation6 + $0x24] sm:$0xf]
    %v558 = vld [vmem:[#allocation6 + $0x28] sm:$0xf]
    %v559 = vld [vmem:[#allocation6 + $0x2c] sm:$0xf]
    %v560 = vld [vmem:[#allocation6 + $0x30] sm:$0xf]
    %v561 = vld [vmem:[#allocation6 + $0x34] sm:$0xf]
    %v562 = vld [vmem:[#allocation6 + $0x38] sm:$0xf]
    %v563 = vld [vmem:[#allocation6 + $0x3c] sm:$0xf]
    %v564 = vld [vmem:[%s5] sm:$0x1]
    %v566 = vperm.slane %v564, 0
    %v584 = vunpack.c.l.b16 %v548
    %v585 = vunpack.c.l.b16 %v549
    %v586 = vunpack.c.l.b16 %v550
    %v587 = vunpack.c.l.b16 %v551
    %v588 = vunpack.c.l.b16 %v552
    %v589 = vunpack.c.l.b16 %v553
    %v590 = vunpack.c.l.b16 %v554
    %v591 = vunpack.c.l.b16 %v555
    %v592 = vunpack.c.l.b16 %v556
    %v593 = vunpack.c.l.b16 %v557
    %v594 = vunpack.c.l.b16 %v558
    %v595 = vunpack.c.l.b16 %v559
    %v596 = vunpack.c.l.b16 %v560
    %v597 = vunpack.c.l.b16 %v561
    %v598 = vunpack.c.l.b16 %v562
    %v599 = vunpack.c.l.b16 %v563
    %v600 = vpack.c.b16 %v585, %v584
    %v601 = vpack.c.b16 %v587, %v586
    %v602 = vpack.c.b16 %v589, %v588
    %v603 = vpack.c.b16 %v591, %v590
    %v604 = vpack.c.b16 %v593, %v592
    %v605 = vpack.c.b16 %v595, %v594
    %v606 = vpack.c.b16 %v597, %v596
    %v607 = vpack.c.b16 %v599, %v598
    %616 = vmatpush.bf16.msra.mxu0 %v607
    %617 = vmatpush.bf16.msra.mxu0 %v606
    %618 = vmatpush.bf16.msra.mxu0 %v605
    %619 = vmatpush.bf16.msra.mxu0 %v604
    %620 = vmatpush.bf16.msra.mxu0 %v603
    %621 = vmatpush.bf16.msra.mxu0 %v602
    %622 = vmatpush.bf16.msra.mxu0 %v601
    %623 = vmatpush.bf16.msra.mxu0 %v600
    %624 = vmatmul.bf16.gmra.mxu0 %v547
    %v625 = vpop.f32.mrf.mxu0
    %v626 = vadd.f32 %v566, %v625
    %v627 = vpop.f32.mrf.mxu0
    %628 = vdwg.mxu0
    %629 = vst [vmem:[#allocation8] sm:$0xff] %v626
    // Predicated region
    $region38: #{tpu_custom_call.1} parent=1 // pred_check
      _
    $region39: #{tpu_custom_call.1} parent=1 // pred_check_branch
      %631 = sbr.rel (0) target = $region41
    $region40: #{tpu_custom_call.1} parent=1 // pred_region
      %633 = vsyncadd [#allocation5], 0
      %s635 = sshll.u32 [#allocation8], 4
      %s636 = int_to_ptr.vmem [resolvable:$true] %s635
      %s637 = sshll.u32 %s6, 4
      %s638 = int_to_ptr.hbm [resolvable:$true] %s637
      %640 = dma.vmem_to_hbm [thread:$0]  %s636, 128, %s638, [#allocation5]
    $region41: #{tpu_custom_call.1} parent=1 // pred_fallthru
      _
    // Predicated region
    $region42: #{tpu_custom_call.1} parent=1 // pred_check
      _
    $region43: #{tpu_custom_call.1} parent=1 // pred_check_branch
      %642 = sbr.rel (0) target = $region45
    $region44: #{tpu_custom_call.1} parent=1 // pred_region
      %644 = dma.done [#allocation5], 128
    $region45: #{tpu_custom_call.1} parent=1 // pred_fallthru
      _
    %645 = vsyncpa [#allocation4], 1
    %646 = vsyncpa [#allocation7], 1
    %647 = vsyncpa [#allocation5], 1

</llo_original>
